<compile_context>
chip_gen: v7x
topology: tpu7x:2x2x1
jax: 0.10.0
libtpu: 0.0.40
codegen_flags: <defaults>
</compile_context>

<pallas_src>
import functools

import jax
import jax.numpy as jnp
from jax.experimental import pallas as pl
from jax.experimental.pallas import tpu as pltpu


def _round_up(x: int, m: int) -> int:
    return (x + m - 1) // m * m


def _head_kernel(x_ref, w1_ref, b1_ref, w2_ref, b2_ref, o_ref, *, mxu_dtype):
    # dense -> tanh -> out_proj (dropout is identity at p=0.0).
    x = x_ref[...]
    w1 = w1_ref[...]
    if mxu_dtype is not None:
        # bf16 MXU fast path (v6e/v7x): cast operands on the VPU (free under an
        # MXU-bound loop); accumulation stays f32 via preferred_element_type.
        x = x.astype(mxu_dtype)
        w1 = w1.astype(mxu_dtype)
    h = jnp.dot(x, w1, preferred_element_type=jnp.float32)
    h = jnp.tanh(h + b1_ref[...].astype(jnp.float32))

    w2 = w2_ref[...]
    op_dtype = mxu_dtype if mxu_dtype is not None else w2_ref.dtype
    h = h.astype(op_dtype)  # no-op for f32 weights; halves operand width otherwise
    if mxu_dtype is not None:
        w2 = w2.astype(mxu_dtype)
    y = jnp.dot(h, w2, preferred_element_type=jnp.float32)
    y = y + b2_ref[...].astype(jnp.float32)
    o_ref[...] = y.astype(o_ref.dtype)


@functools.partial(jax.jit, static_argnames=("tm", "mxu_dtype"))
def roberta_classification_head(features, w_dense, b_dense, w_out, b_out, *,
                                tm=512, mxu_dtype=None):
    """features: [B, input_dim]; w_dense: [input_dim, inner_dim];
    b_dense: [inner_dim] or [1, inner_dim]; w_out: [inner_dim, num_classes];
    b_out: [num_classes] or [1, num_classes]  ->  [B, num_classes]"""
    B, D_in = features.shape
    inner = w_dense.shape[1]
    n_cls = w_out.shape[1]

    # Normalize biases (PyTorch nn.Linear stores them as (N,)).
    b_dense = jnp.asarray(b_dense).reshape(1, inner)
    b_out = jnp.asarray(b_out).reshape(1, n_cls)

    # ---- batch tile selection ----------------------------------------------
    TM = min(tm, _round_up(B, 8))
    # v7x megacore: prefer >= 2 grid steps when the batch is big enough, so
    # dimension_semantics=("parallel",) actually shards tiles across both TCs.
    if B > 16 and (B + TM - 1) // TM < 2:
        TM = _round_up((B + 1) // 2, 8)
    # Even tile split to minimize zero-row padding (e.g. B=300 -> 2x152, not 2x256).
    n_tiles = max(1, (B + TM - 1) // TM)
    TM = _round_up((B + n_tiles - 1) // n_tiles, 8)
    Bp = n_tiles * TM
    if Bp != B:
        features = jnp.pad(features, ((0, Bp - B), (0, 0)))

    # Lane-dense output: pad num_classes to a multiple of 128 (and no wider) so
    # the per-step store is an unmasked full-lane vst.
    Np = _round_up(n_cls, 128)
    if Np != n_cls:
        w_out = jnp.pad(w_out, ((0, 0), (0, Np - n_cls)))
        b_out = jnp.pad(b_out, ((0, 0), (0, Np - n_cls)))

    # ---- explicit VMEM budget (weights single-buffered, x/out double) -------
    x_bytes = features.dtype.itemsize
    w_bytes = w_dense.dtype.itemsize
    out_bytes = features.dtype.itemsize
    vmem_needed = (
        2 * TM * D_in * x_bytes                      # x tile, double-buffered
        + 2 * TM * Np * out_bytes                    # out tile, double-buffered
        + (D_in * inner + inner * Np + inner + Np) * w_bytes  # resident params
        + TM * inner * 4 + TM * Np * 4               # f32 intermediates
    )
    vmem_limit = int(min(max(int(vmem_needed * 1.5) + (1 << 20), 8 << 20), 60 << 20))

    # ---- scheduler hint ------------------------------------------------------
    flops = 2 * Bp * (D_in * inner + inner * Np)
    bytes_accessed = (Bp * D_in * x_bytes
                      + (D_in * inner + inner * Np + inner + Np) * w_bytes
                      + Bp * Np * out_bytes)
    cost = pl.CostEstimate(flops=flops, transcendentals=Bp * inner,
                           bytes_accessed=bytes_accessed)

    resident = pl.Buffered(buffer_count=1)  # constant-index blocks: single-buffer
    out = pl.pallas_call(
        functools.partial(_head_kernel, mxu_dtype=mxu_dtype),
        out_shape=jax.ShapeDtypeStruct((Bp, Np), features.dtype),
        grid_spec=pl.GridSpec(
            grid=(n_tiles,),
            in_specs=[
                # x tile marches down the batch; weights/biases stay VMEM-resident.
                pl.BlockSpec((TM, D_in), lambda i: (i, 0)),
                pl.BlockSpec((D_in, inner), lambda i: (0, 0), pipeline_mode=resident),
                pl.BlockSpec((1, inner), lambda i: (0, 0), pipeline_mode=resident),
                pl.BlockSpec((inner, Np), lambda i: (0, 0), pipeline_mode=resident),
                pl.BlockSpec((1, Np), lambda i: (0, 0), pipeline_mode=resident),
            ],
            out_specs=pl.BlockSpec((TM, Np), lambda i: (i, 0)),
        ),
        compiler_params=pltpu.CompilerParams(
            # Independent batch tiles -> shard grid steps across TCs (v7x).
            dimension_semantics=("parallel",),
            vmem_limit_bytes=vmem_limit),
        cost_estimate=cost,
    )(features, w_dense, b_dense, w_out, b_out)

    # Slice off batch padding and the lane padding of the class dimension.
    return out[:B, :n_cls]


def reference(features, w_dense, b_dense, w_out, b_out):
    h = jnp.tanh(features.astype(jnp.float32) @ w_dense.astype(jnp.float32)
                 + jnp.asarray(b_dense, jnp.float32).reshape(1, -1))
    y = h @ w_out.astype(jnp.float32) + jnp.asarray(b_out, jnp.float32).reshape(1, -1)
    return y.astype(features.dtype)


if __name__ == "__main__":
    # Small, module-consistent shapes: batch=8, input_dim=32, inner_dim=32,
    # num_classes=8 (real MoleBlend/RoBERTa sizes would be B>=256, D=768/1024;
    # the kernel tiles/pads automatically for either regime).
    B, input_dim, inner_dim, num_classes = 8, 32, 32, 8

    key = jax.random.PRNGKey(0)
    k_feat, k_w1, k_b1, k_w2, k_b2 = jax.random.split(key, 5)

    features = jax.random.normal(k_feat, (B, input_dim), dtype=jnp.float32)
    # Deterministic synthetic parameters (nn.Linear layout, stored as [in, out]).
    w_dense = jax.random.normal(k_w1, (input_dim, inner_dim), dtype=jnp.float32) * 0.05
    b_dense = jax.random.normal(k_b1, (inner_dim,), dtype=jnp.float32) * 0.01
    w_out = jax.random.normal(k_w2, (inner_dim, num_classes), dtype=jnp.float32) * 0.05
    b_out = jax.random.normal(k_b2, (num_classes,), dtype=jnp.float32) * 0.01

    ref = reference(features, w_dense, b_dense, w_out, b_out)

    # 1) Exact f32-MXU path.
    out = roberta_classification_head(features, w_dense, b_dense, w_out, b_out)
    out = jax.block_until_ready(out)
    assert out.shape == (B, num_classes)
    assert jnp.allclose(out, ref, atol=1e-5, rtol=1e-5), "f32 mismatch vs reference"

    # 2) bf16-MXU fast path (v6e/v7x native MXU dtype) -- looser tolerance.
    out_bf = roberta_classification_head(features, w_dense, b_dense, w_out, b_out,
                                         mxu_dtype=jnp.bfloat16)
    out_bf = jax.block_until_ready(out_bf)
    assert jnp.allclose(out_bf, ref, atol=2e-2, rtol=2e-2), "bf16 mismatch vs reference"

    # 3) Multi-tile path (exercises even batch split, >=2 grid steps, pad slice-off).
    B2 = 36
    feats2 = jax.random.normal(k_feat, (B2, input_dim), dtype=jnp.float32)
    ref2 = reference(feats2, w_dense, b_dense, w_out, b_out)
    out2 = roberta_classification_head(feats2, w_dense, b_dense, w_out, b_out, tm=512)
    out2 = jax.block_until_ready(out2)
    assert out2.shape == (B2, num_classes)
    assert jnp.allclose(out2, ref2, atol=1e-5, rtol=1e-5), "multi-tile mismatch vs reference"

    print("KERNEL_OK")
</pallas_src>

<mosaic_0001>
module attributes {stable_mosaic.version = 11 : i64} {
  func.func @_head_kernel(%arg0: i32, %arg1: memref<8x32xf32, #tpu.memory_space<vmem>>, %arg2: memref<32x32xf32, #tpu.memory_space<vmem>>, %arg3: memref<1x32xf32, #tpu.memory_space<vmem>>, %arg4: memref<32x128xf32, #tpu.memory_space<vmem>>, %arg5: memref<1x128xf32, #tpu.memory_space<vmem>>, %arg6: memref<8x128xf32, #tpu.memory_space<vmem>>) attributes {dimension_semantics = [#tpu.dimension_semantics<parallel>], iteration_bounds = array<i64: 1>, scalar_prefetch = 0 : i64, scratch_operands = 0 : i64, tpu.core_type = #tpu.core_type<tc>, window_params = [{transform_indices = @transform_0, window_bounds = array<i64: 8, 32>}, {pipeline_mode = #tpu.pipeline_mode<synchronous>, transform_indices = @transform_1, window_bounds = array<i64: 32, 32>}, {pipeline_mode = #tpu.pipeline_mode<synchronous>, transform_indices = @transform_2, window_bounds = array<i64: 1, 32>}, {pipeline_mode = #tpu.pipeline_mode<synchronous>, transform_indices = @transform_3, window_bounds = array<i64: 32, 128>}, {pipeline_mode = #tpu.pipeline_mode<synchronous>, transform_indices = @transform_4, window_bounds = array<i64: 1, 128>}, {transform_indices = @transform_5, window_bounds = array<i64: 8, 128>}]} {
    %c0 = arith.constant 0 : index
    %c0_0 = arith.constant 0 : index
    %0 = vector.load %arg1[%c0, %c0_0] : memref<8x32xf32, #tpu.memory_space<vmem>>, vector<8x32xf32>
    %c0_1 = arith.constant 0 : index
    %c0_2 = arith.constant 0 : index
    %1 = vector.load %arg2[%c0_1, %c0_2] : memref<32x32xf32, #tpu.memory_space<vmem>>, vector<32x32xf32>
    %cst = arith.constant dense<0.000000e+00> : vector<8x32xf32>
    %2 = tpu.matmul %0, %1, %cst {dimension_numbers = #tpu.dot_dimension_numbers<[1], [0], [0], [1], [0, 0, 1, 1], [], []>} : vector<8x32xf32>, vector<32x32xf32>, vector<8x32xf32> -> vector<8x32xf32>
    %c0_3 = arith.constant 0 : index
    %c0_4 = arith.constant 0 : index
    %3 = vector.load %arg3[%c0_3, %c0_4] : memref<1x32xf32, #tpu.memory_space<vmem>>, vector<1x32xf32>
    %4 = vector.broadcast %3 : vector<1x32xf32> to vector<8x32xf32>
    %5 = arith.addf %2, %4 : vector<8x32xf32>
    %6 = math.tanh %5 : vector<8x32xf32>
    %c0_5 = arith.constant 0 : index
    %c0_6 = arith.constant 0 : index
    %7 = vector.load %arg4[%c0_5, %c0_6] : memref<32x128xf32, #tpu.memory_space<vmem>>, vector<32x128xf32>
    %cst_7 = arith.constant dense<0.000000e+00> : vector<8x128xf32>
    %8 = tpu.matmul %6, %7, %cst_7 {dimension_numbers = #tpu.dot_dimension_numbers<[1], [0], [0], [1], [0, 0, 1, 1], [], []>} : vector<8x32xf32>, vector<32x128xf32>, vector<8x128xf32> -> vector<8x128xf32>
    %c0_8 = arith.constant 0 : index
    %c0_9 = arith.constant 0 : index
    %9 = vector.load %arg5[%c0_8, %c0_9] : memref<1x128xf32, #tpu.memory_space<vmem>>, vector<1x128xf32>
    %10 = vector.broadcast %9 : vector<1x128xf32> to vector<8x128xf32>
    %11 = arith.addf %8, %10 : vector<8x128xf32>
    %c0_10 = arith.constant 0 : index
    %c0_11 = arith.constant 0 : index
    %12 = vector.load %arg6[%c0_10, %c0_11] : memref<8x128xf32, #tpu.memory_space<vmem>>, vector<8x128xf32>
    tpu.vector_store %arg6[%c0_10, %c0_11], %11 {strides = array<i32>} : memref<8x128xf32, #tpu.memory_space<vmem>>, vector<8x128xf32>,
    return
  }
  func.func @transform_0(%arg0: i32) -> (i32, i32) {
    %c0_i32 = arith.constant 0 : i32
    %c0_i32_0 = arith.constant 0 : i32
    return %arg0, %c0_i32 : i32, i32
  }
  func.func @transform_1(%arg0: i32) -> (i32, i32) {
    %c0_i32 = arith.constant 0 : i32
    %c0_i32_0 = arith.constant 0 : i32
    %c0_i32_1 = arith.constant 0 : i32
    return %c0_i32, %c0_i32_0 : i32, i32
  }
  func.func @transform_2(%arg0: i32) -> (i32, i32) {
    %c0_i32 = arith.constant 0 : i32
    %c0_i32_0 = arith.constant 0 : i32
    %c0_i32_1 = arith.constant 0 : i32
    return %c0_i32, %c0_i32_0 : i32, i32
  }
  func.func @transform_3(%arg0: i32) -> (i32, i32) {
    %c0_i32 = arith.constant 0 : i32
    %c0_i32_0 = arith.constant 0 : i32
    %c0_i32_1 = arith.constant 0 : i32
    return %c0_i32, %c0_i32_0 : i32, i32
  }
  func.func @transform_4(%arg0: i32) -> (i32, i32) {
    %c0_i32 = arith.constant 0 : i32
    %c0_i32_0 = arith.constant 0 : i32
    %c0_i32_1 = arith.constant 0 : i32
    return %c0_i32, %c0_i32_0 : i32, i32
  }
  func.func @transform_5(%arg0: i32) -> (i32, i32) {
    %c0_i32 = arith.constant 0 : i32
    %c0_i32_0 = arith.constant 0 : i32
    return %arg0, %c0_i32 : i32, i32
  }
}

</mosaic_0001>

<llo_original>
// kernel: roberta_classification_head.1
$region0: #{roberta_classification_head.1}
  #allocation0 [shape = 'u32[]', space=smem, size = 0x4, offset = 0x4, fixed_abs, tag = 'smem constant byte address 0x4 - core index']
  #allocation1 [shape = 'u32[144,128]{1,0:T(1,128)}', space=vmem, size = 0x12000, scoped, tag = 'internal scratch']
  %s0 = inlined_call_operand.vmem [shape: f32[8,32], index: 0, kind: input, shape index: {}]
  %s1 = inlined_call_operand.vmem [shape: f32[32,32], index: 1, kind: input, shape index: {}]
  %s2 = inlined_call_operand.vmem [shape: f32[1,32], index: 2, kind: input, shape index: {}]
  %s3 = inlined_call_operand.vmem [shape: f32[32,128], index: 3, kind: input, shape index: {}]
  %s4 = inlined_call_operand.vmem [shape: f32[1,128], index: 4, kind: input, shape index: {}]
  %s5 = inlined_call_operand.hbm [shape: f32[8,128], index: 5, kind: output, shape index: {}]
  %s6 = sld [smem:[#allocation0]]
  $region30: #{roberta_classification_head.1} parent=0
    _
  %s8 = ssub.s32 1, %s6
  %s9 = scalar_select 0, %s8, %s6
  $region1: #{roberta_classification_head.1} parent=0
    #allocation2 [shape = 'u8[4096]{0}', space=vmem, size = 0x1000, scoped, tag = 'output window, operand 0, single buffered']
    #allocation3 [shape = 's32[1]{0}', space=sflag, size = 0x4, scoped, tag = 'scoped memory for roberta_classification_head.1']
    %10 = vsyncpa [#allocation3], 0
    // Predicated region
    $region2: #{roberta_classification_head.1} parent=1 // pred_check
      _
    $region3: #{roberta_classification_head.1} parent=1 // pred_check_branch
      %12 = sbr.rel (0) target = $region5
    $region4: #{roberta_classification_head.1} parent=1 // pred_region
      _
    $region5: #{roberta_classification_head.1} parent=1 // pred_fallthru
      _
    // Predicated region
    $region6: #{roberta_classification_head.1} parent=1 // pred_check
      _
    $region7: #{roberta_classification_head.1} parent=1 // pred_check_branch
      %14 = sbr.rel (0) target = $region9
    $region8: #{roberta_classification_head.1} parent=1 // pred_region
      _
    $region9: #{roberta_classification_head.1} parent=1 // pred_fallthru
      _
    // Predicated region
    $region10: #{roberta_classification_head.1} parent=1 // pred_check
      _
    $region11: #{roberta_classification_head.1} parent=1 // pred_check_branch
      %16 = sbr.rel (0) target = $region13
    $region12: #{roberta_classification_head.1} parent=1 // pred_region
      _
    $region13: #{roberta_classification_head.1} parent=1 // pred_fallthru
      _
    // Predicated region
    $region14: #{roberta_classification_head.1} parent=1 // pred_check
      _
    $region15: #{roberta_classification_head.1} parent=1 // pred_check_branch
      %18 = sbr.rel (0) target = $region17
    $region16: #{roberta_classification_head.1} parent=1 // pred_region
      _
    $region17: #{roberta_classification_head.1} parent=1 // pred_fallthru
      _
    // Predicated region
    $region18: #{roberta_classification_head.1} parent=1 // pred_check
      _
    $region19: #{roberta_classification_head.1} parent=1 // pred_check_branch
      %20 = sbr.rel (0) target = $region21
    $region20: #{roberta_classification_head.1} parent=1 // pred_region
      _
    $region21: #{roberta_classification_head.1} parent=1 // pred_fallthru
      _
    %v21 = vld [vmem:[%s0] sm:$0xff]
    %v22 = vld [vmem:[%s1] sm:$0xff]
    %v23 = vld [vmem:[%s1 + $0x8] sm:$0xff]
    %v24 = vld [vmem:[%s1 + $0x10] sm:$0xff]
    %v25 = vld [vmem:[%s1 + $0x18] sm:$0xff]
    %v26 = vld [vmem:[%s2] sm:$0x1]
    %v28 = vlaneseq
    %v29 = vshrl.u32 %v28, 7
    %v30 = vsub.s32 0, %v29
    %v31 = vrot.slane %v26, %v30
    %vm33 = vcmask 261120
    %v35 = vsel %vm33, %v21, 0
    %37 = vmatprep.subr.mxu0 0.0
    %38 = vmatpush1.msra.mxu0 %v22
    %39 = vmatprep.subr.mxu0 0.0
    %40 = vmatpush1.msra.mxu0 %v23
    %41 = vmatprep.subr.mxu0 0.0
    %42 = vmatpush1.msra.mxu0 %v24
    %43 = vmatprep.subr.mxu0 0.0
    %44 = vmatpush1.msra.mxu0 %v25
    %45 = vmatprep.subr.mxu0 0.0
    %46 = vmatpush1.msra.mxu0 0.0
    %47 = vmatprep.subr.mxu0 0.0
    %48 = vmatpush1.msra.mxu0 0.0
    %49 = vmatprep.subr.mxu0 0.0
    %50 = vmatpush1.msra.mxu0 0.0
    %51 = vmatprep.subr.mxu0 0.0
    %52 = vmatpush1.msra.mxu0 0.0
    %53 = vmatprep.subr.mxu0 0.0
    %54 = vmatpush1.msra.mxu0 0.0
    %55 = vmatprep.subr.mxu0 0.0
    %56 = vmatpush1.msra.mxu0 0.0
    %57 = vmatprep.subr.mxu0 0.0
    %58 = vmatpush1.msra.mxu0 0.0
    %59 = vmatprep.subr.mxu0 0.0
    %60 = vmatpush1.msra.mxu0 0.0
    %61 = vmatprep.subr.mxu0 0.0
    %62 = vmatpush1.msra.mxu0 0.0
    %63 = vmatprep.subr.mxu0 0.0
    %64 = vmatpush1.msra.mxu0 0.0
    %65 = vmatprep.subr.mxu0 0.0
    %66 = vmatpush1.msra.mxu0 0.0
    %67 = vmatprep.subr.mxu0 0.0
    %68 = vmatpush1.msra.mxu0 0.0
    %69 = vmatprep.subr.mxu0 0.0
    %70 = vmatpush1.msra.mxu0 0.0
    %71 = vmatprep.subr.mxu0 0.0
    %72 = vmatpush1.msra.mxu0 0.0
    %73 = vmatprep.subr.mxu0 0.0
    %74 = vmatpush1.msra.mxu0 0.0
    %75 = vmatprep.subr.mxu0 0.0
    %76 = vmatpush1.msra.mxu0 0.0
    %77 = vmatprep.subr.mxu0 0.0
    %78 = vmatpush1.msra.mxu0 0.0
    %79 = vmatprep.subr.mxu0 0.0
    %80 = vmatpush1.msra.mxu0 0.0
    %81 = vmatprep.subr.mxu0 0.0
    %82 = vmatpush1.msra.mxu0 0.0
    %83 = vmatprep.subr.mxu0 0.0
    %84 = vmatpush1.msra.mxu0 0.0
    %85 = vmatprep.subr.mxu0 0.0
    %86 = vmatpush1.msra.mxu0 0.0
    %87 = vmatprep.subr.mxu0 0.0
    %88 = vmatpush1.msra.mxu0 0.0
    %89 = vmatprep.subr.mxu0 0.0
    %90 = vmatpush1.msra.mxu0 0.0
    %91 = vmatprep.subr.mxu0 0.0
    %92 = vmatpush1.msra.mxu0 0.0
    %93 = vmatprep.subr.mxu0 0.0
    %94 = vmatpush1.msra.mxu0 0.0
    %95 = vmatprep.subr.mxu0 0.0
    %96 = vmatpush1.msra.mxu0 0.0
    %97 = vmatprep.subr.mxu0 0.0
    %98 = vmatpush1.msra.mxu0 0.0
    %99 = vmatprep.subr.mxu0 0.0
    %100 = vmatpush1.msra.mxu0 0.0
    %101 = vmatprep.mubr.f32.mxu0 0.0
    %102 = vmatmul.mubr.f32.gmra.mrb[0].mxu0 %v35
    %v103 = vpop.f32.mrb[0].mxu0
    %v104 = vadd.f32 %v31, %v103
    %v105 = vpop.f32.mrb[0].mxu0
    %106 = vdwg.mxu0
    %v107 = vtanh.pop %v104
    %v108 = vld [vmem:[%s3] sm:$0xff]
    %v109 = vld [vmem:[%s3 + $0x8] sm:$0xff]
    %v110 = vld [vmem:[%s3 + $0x10] sm:$0xff]
    %v111 = vld [vmem:[%s3 + $0x18] sm:$0xff]
    %v112 = vld [vmem:[%s4] sm:$0x1]
    %v114 = vlaneseq
    %v115 = vshrl.u32 %v114, 7
    %v116 = vsub.s32 0, %v115
    %v117 = vrot.slane %v112, %v116
    %v120 = vsel %vm33, %v107, 0
    %122 = vmatprep.subr.mxu0 0.0
    %123 = vmatpush1.msra.mxu0 %v108
    %124 = vmatprep.subr.mxu0 0.0
    %125 = vmatpush1.msra.mxu0 %v109
    %126 = vmatprep.subr.mxu0 0.0
    %127 = vmatpush1.msra.mxu0 %v110
    %128 = vmatprep.subr.mxu0 0.0
    %129 = vmatpush1.msra.mxu0 %v111
    %130 = vmatprep.subr.mxu0 0.0
    %131 = vmatpush1.msra.mxu0 0.0
    %132 = vmatprep.subr.mxu0 0.0
    %133 = vmatpush1.msra.mxu0 0.0
    %134 = vmatprep.subr.mxu0 0.0
    %135 = vmatpush1.msra.mxu0 0.0
    %136 = vmatprep.subr.mxu0 0.0
    %137 = vmatpush1.msra.mxu0 0.0
    %138 = vmatprep.subr.mxu0 0.0
    %139 = vmatpush1.msra.mxu0 0.0
    %140 = vmatprep.subr.mxu0 0.0
    %141 = vmatpush1.msra.mxu0 0.0
    %142 = vmatprep.subr.mxu0 0.0
    %143 = vmatpush1.msra.mxu0 0.0
    %144 = vmatprep.subr.mxu0 0.0
    %145 = vmatpush1.msra.mxu0 0.0
    %146 = vmatprep.subr.mxu0 0.0
    %147 = vmatpush1.msra.mxu0 0.0
    %148 = vmatprep.subr.mxu0 0.0
    %149 = vmatpush1.msra.mxu0 0.0
    %150 = vmatprep.subr.mxu0 0.0
    %151 = vmatpush1.msra.mxu0 0.0
    %152 = vmatprep.subr.mxu0 0.0
    %153 = vmatpush1.msra.mxu0 0.0
    %154 = vmatprep.subr.mxu0 0.0
    %155 = vmatpush1.msra.mxu0 0.0
    %156 = vmatprep.subr.mxu0 0.0
    %157 = vmatpush1.msra.mxu0 0.0
    %158 = vmatprep.subr.mxu0 0.0
    %159 = vmatpush1.msra.mxu0 0.0
    %160 = vmatprep.subr.mxu0 0.0
    %161 = vmatpush1.msra.mxu0 0.0
    %162 = vmatprep.subr.mxu0 0.0
    %163 = vmatpush1.msra.mxu0 0.0
    %164 = vmatprep.subr.mxu0 0.0
    %165 = vmatpush1.msra.mxu0 0.0
    %166 = vmatprep.subr.mxu0 0.0
    %167 = vmatpush1.msra.mxu0 0.0
    %168 = vmatprep.subr.mxu0 0.0
    %169 = vmatpush1.msra.mxu0 0.0
    %170 = vmatprep.subr.mxu0 0.0
    %171 = vmatpush1.msra.mxu0 0.0
    %172 = vmatprep.subr.mxu0 0.0
    %173 = vmatpush1.msra.mxu0 0.0
    %174 = vmatprep.subr.mxu0 0.0
    %175 = vmatpush1.msra.mxu0 0.0
    %176 = vmatprep.subr.mxu0 0.0
    %177 = vmatpush1.msra.mxu0 0.0
    %178 = vmatprep.subr.mxu0 0.0
    %179 = vmatpush1.msra.mxu0 0.0
    %180 = vmatprep.subr.mxu0 0.0
    %181 = vmatpush1.msra.mxu0 0.0
    %182 = vmatprep.subr.mxu0 0.0
    %183 = vmatpush1.msra.mxu0 0.0
    %184 = vmatprep.subr.mxu0 0.0
    %185 = vmatpush1.msra.mxu0 0.0
    %186 = vmatprep.mubr.f32.mxu0 0.0
    %187 = vmatmul.mubr.f32.gmra.mrb[0].mxu0 %v120
    %v188 = vpop.f32.mrb[0].mxu0
    %v189 = vadd.f32 %v117, %v188
    %v190 = vpop.f32.mrb[0].mxu0
    %191 = vdwg.mxu0
    %192 = vst [vmem:[#allocation2] sm:$0xff] %v189
    // Predicated region
    $region22: #{roberta_classification_head.1} parent=1 // pred_check
      _
    $region23: #{roberta_classification_head.1} parent=1 // pred_check_branch
      %194 = sbr.rel (0) target = $region25
    $region24: #{roberta_classification_head.1} parent=1 // pred_region
      %s196 = ssub.s32 128, 128
      %197 = vsyncadd [#allocation3], %s196
      %s199 = sshll.u32 [#allocation2], 4
      %s200 = int_to_ptr.vmem [resolvable:$true] %s199
      %202 = dma.vmem_to_hbm [thread:$0]  %s200, 128, %s5, [#allocation3]
    $region25: #{roberta_classification_head.1} parent=1 // pred_fallthru
      _
    // Predicated region
    $region26: #{roberta_classification_head.1} parent=1 // pred_check
      _
    $region27: #{roberta_classification_head.1} parent=1 // pred_check_branch
      %204 = sbr.rel (0) target = $region29
    $region28: #{roberta_classification_head.1} parent=1 // pred_region
      %205 = dma.done [#allocation3], 128
    $region29: #{roberta_classification_head.1} parent=1 // pred_fallthru
      _
    %206 = vsyncpa [#allocation3], 1

</llo_original>
